<compile_context>
chip_gen: v5e
topology: v5e:2x2
jax: 0.10.0
libtpu: 0.0.40
codegen_flags: <defaults>
</compile_context>

<pallas_src>
import functools

import jax
import jax.numpy as jnp
from jax.experimental import pallas as pl
from jax.experimental.pallas import tpu as pltpu


def _round_up(x, m):
    return (x + m - 1) // m * m


def _vmem_limit_bytes():
    # 75% of physical VMEM, capped at 100 MiB (96 MiB on v5e/v6e, 48 MiB v7x).
    try:
        cap = int(pltpu.get_tpu_info().vmem_capacity_bytes)
    except Exception:
        cap = 64 * 1024 * 1024
    return min((cap * 3) // 4, 100 * 1024 * 1024)


def _pick_batch_block(n, per_image_bytes, budget):
    # Largest divisor of n in {8,4,2} that still leaves >= 2 grid steps
    # (megacore) and fits the double-buffered per-step VMEM budget.
    for nb in (8, 4, 2):
        if n % nb == 0 and n // nb >= 2 and 2 * nb * per_image_bytes <= budget:
            return nb
    return 1


# ---------------------------------------------------------------------------
# Pallas kernel: KH matmuls over a KW-folded contraction, bias fused in store
# ---------------------------------------------------------------------------
def _conv_kernel(x_ref, w_ref, b_ref, o_ref, *, oh, ow, kh, nb):
    # x_ref: (NB, Hp, OW, KW*C)   bf16  KW-folded, spatially padded images
    # w_ref: (KH, KW*C, OC_TILE)  bf16  per-row-tap weight matrices (resident)
    # b_ref: (1, OC_TILE)         f32   bias row
    # o_ref: (NB, OH*OW, OC_TILE) bf16  lane-dense output tile
    kwc = x_ref.shape[-1]
    bias = b_ref[...]
    for i in range(nb):                      # statically unrolled, small NB
        img = x_ref[i]                       # (Hp, OW, KW*C)
        acc = None
        for dh in range(kh):                 # statically unrolled KH row taps
            xs = img[dh:dh + oh].reshape(oh * ow, kwc)     # (OH*OW, KW*C)
            part = jnp.dot(xs, w_ref[dh],
                           preferred_element_type=jnp.float32)
            acc = part if acc is None else acc + part
        o_ref[i] = (acc + bias).astype(o_ref.dtype)


# ---------------------------------------------------------------------------
# MetaConv2d forward (stride=1, dilation=1, groups=1; symmetric padding)
# ---------------------------------------------------------------------------
@functools.partial(jax.jit, static_argnames=("padding",))
def meta_conv2d_forward(x_nchw, weight, bias, *, padding=1):
    # x_nchw: (N, C, H, W), weight: (OC, C, KH, KW), bias: (OC,)
    N, C, H, W = x_nchw.shape
    OC, _, KH, KW = weight.shape
    pad = padding
    Hp, Wp = H + 2 * pad, W + 2 * pad
    OH, OW = Hp - KH + 1, Wp - KW + 1
    KWC = KW * C
    OCp = _round_up(OC, 128)

    # OC tiling (second, parallel grid axis) for large channel counts.
    if OCp <= 256:
        oc_tile = OCp
    elif OCp % 256 == 0:
        oc_tile = 256
    else:
        oc_tile = 128

    vmem_limit = _vmem_limit_bytes()
    per_image_bytes = Hp * OW * KWC * 2 + OH * OW * oc_tile * 2
    nb = _pick_batch_block(N, per_image_bytes, vmem_limit // 2)

    # --- wrapper-side glue (no HBM im2col): pad, NHWC, bf16, KW fold --------
    x_nhwc = jnp.pad(x_nchw, ((0, 0), (0, 0), (pad, pad), (pad, pad)))
    x_nhwc = x_nhwc.transpose(0, 2, 3, 1).astype(jnp.bfloat16)   # (N,Hp,Wp,C)
    # Fold KW taps into the last (lane) dim, column order dw*C + c.
    x_f = jnp.concatenate(
        [x_nhwc[:, :, dw:dw + OW, :] for dw in range(KW)], axis=-1)

    # weight (OC, C, KH, KW) -> (KH, KW*C, OCp) matching the fold order.
    w_f = weight.transpose(2, 3, 1, 0).reshape(KH, KWC, OC)
    w_f = jnp.pad(w_f, ((0, 0), (0, 0), (0, OCp - OC))).astype(jnp.bfloat16)

    b_row = jnp.pad(bias, (0, OCp - OC)).reshape(1, OCp).astype(jnp.float32)

    kernel = functools.partial(_conv_kernel, oh=OH, ow=OW, kh=KH, nb=nb)

    flops = 2 * N * OH * OW * KH * KWC * OCp
    bytes_accessed = (N * Hp * OW * KWC * 2 + KH * KWC * OCp * 2
                      + OCp * 4 + N * OH * OW * OCp * 2)

    out = pl.pallas_call(
        kernel,
        out_shape=jax.ShapeDtypeStruct((N, OH * OW, OCp), jnp.bfloat16),
        grid_spec=pltpu.PrefetchScalarGridSpec(
            num_scalar_prefetch=0,
            grid=(N // nb, OCp // oc_tile),
            in_specs=[
                # NB folded images per step
                pl.BlockSpec((nb, Hp, OW, KWC), lambda n, j: (n, 0, 0, 0)),
                # weight stack: only the current OC tile, resident across n
                pl.BlockSpec((KH, KWC, oc_tile), lambda n, j: (0, 0, j)),
                # bias row for the current OC tile
                pl.BlockSpec((1, oc_tile), lambda n, j: (0, j)),
            ],
            out_specs=pl.BlockSpec((nb, OH * OW, oc_tile),
                                   lambda n, j: (n, 0, j)),
        ),
        compiler_params=pltpu.CompilerParams(
            dimension_semantics=("parallel", "parallel"),
            vmem_limit_bytes=vmem_limit,
        ),
        cost_estimate=pl.CostEstimate(
            flops=flops, transcendentals=0, bytes_accessed=bytes_accessed),
    )(x_f, w_f, b_row)

    # slice the valid channels, back to NCHW
    out = out[:, :, :OC].reshape(N, OH, OW, OC).transpose(0, 3, 1, 2)
    return out.astype(x_nchw.dtype)


if __name__ == "__main__":
    # MetaConv2d(4, 8, kernel_size=3, stride=1, padding=1) with bias.
    N, C, H, W = 2, 4, 16, 16
    OC, KH, KW = 8, 3, 3
    padding = 1

    key = jax.random.PRNGKey(0)
    kx, kw_key, kb = jax.random.split(key, 3)

    x = jax.random.normal(kx, (N, C, H, W), dtype=jnp.float32)

    # Deterministic, PyTorch-Conv2d-style init: U(-1/sqrt(fan_in), 1/sqrt(fan_in))
    fan_in = C * KH * KW
    bound = 1.0 / (fan_in ** 0.5)
    weight = jax.random.uniform(kw_key, (OC, C, KH, KW), jnp.float32, -bound, bound)
    bias = jax.random.uniform(kb, (OC,), jnp.float32, -bound, bound)

    y = meta_conv2d_forward(x, weight, bias, padding=padding)
    y = jax.block_until_ready(y)

    # Reference (same semantics as F.conv2d).  Tolerance reflects bf16 MXU
    # operands / bf16 output with f32 accumulation.
    y_ref = jax.lax.conv_general_dilated(
        x, weight, window_strides=(1, 1),
        padding=((padding, padding), (padding, padding)),
        dimension_numbers=("NCHW", "OIHW", "NCHW"),
    ) + bias.reshape(1, OC, 1, 1)

    assert y.shape == (N, OC, H, W)
    max_err = float(jnp.max(jnp.abs(y - y_ref)))
    assert jnp.allclose(y, y_ref, atol=5e-2, rtol=5e-2), max_err
    print("KERNEL_OK")
</pallas_src>

<mosaic_0001>
module attributes {stable_mosaic.version = 11 : i64} {
  func.func @_conv_kernel(%arg0: i32, %arg1: i32, %arg2: memref<1x18x16x12xbf16, #tpu.memory_space<vmem>>, %arg3: memref<3x12x128xbf16, #tpu.memory_space<vmem>>, %arg4: memref<1x128xf32, #tpu.memory_space<vmem>>, %arg5: memref<1x256x128xbf16, #tpu.memory_space<vmem>>) attributes {dimension_semantics = [#tpu.dimension_semantics<parallel>, #tpu.dimension_semantics<parallel>], iteration_bounds = array<i64: 2, 1>, scalar_prefetch = 0 : i64, scratch_operands = 0 : i64, tpu.core_type = #tpu.core_type<tc>, window_params = [{transform_indices = @transform_0, window_bounds = array<i64: 1, 18, 16, 12>}, {transform_indices = @transform_1, window_bounds = array<i64: 3, 12, 128>}, {transform_indices = @transform_2, window_bounds = array<i64: 1, 128>}, {transform_indices = @transform_3, window_bounds = array<i64: 1, 256, 128>}]} {
    %c0 = arith.constant 0 : index
    %c0_0 = arith.constant 0 : index
    %0 = vector.load %arg4[%c0, %c0_0] : memref<1x128xf32, #tpu.memory_space<vmem>>, vector<1x128xf32>
    %c0_1 = arith.constant 0 : index
    %c0_2 = arith.constant 0 : index
    %c0_3 = arith.constant 0 : index
    %c0_4 = arith.constant 0 : index
    %1 = vector.load %arg2[%c0_1, %c0_2, %c0_3, %c0_4] : memref<1x18x16x12xbf16, #tpu.memory_space<vmem>>, vector<1x18x16x12xbf16>
    %2 = vector.shape_cast %1 : vector<1x18x16x12xbf16> to vector<18x16x12xbf16>
    %3 = vector.extract_strided_slice %2 {offsets = [0, 0, 0], sizes = [16, 16, 12], strides = [1, 1, 1]} : vector<18x16x12xbf16> to vector<16x16x12xbf16>
    %4 = vector.shape_cast %3 : vector<16x16x12xbf16> to vector<256x12xbf16>
    %c0_5 = arith.constant 0 : index
    %c0_6 = arith.constant 0 : index
    %c0_7 = arith.constant 0 : index
    %5 = vector.load %arg3[%c0_5, %c0_6, %c0_7] : memref<3x12x128xbf16, #tpu.memory_space<vmem>>, vector<1x12x128xbf16>
    %6 = vector.shape_cast %5 : vector<1x12x128xbf16> to vector<12x128xbf16>
    %cst = arith.constant dense<0.000000e+00> : vector<256x128xf32>
    %7 = tpu.matmul %4, %6, %cst {dimension_numbers = #tpu.dot_dimension_numbers<[1], [0], [0], [1], [0, 0, 1, 1], [], []>} : vector<256x12xbf16>, vector<12x128xbf16>, vector<256x128xf32> -> vector<256x128xf32>
    %8 = vector.extract_strided_slice %2 {offsets = [1, 0, 0], sizes = [16, 16, 12], strides = [1, 1, 1]} : vector<18x16x12xbf16> to vector<16x16x12xbf16>
    %9 = vector.shape_cast %8 : vector<16x16x12xbf16> to vector<256x12xbf16>
    %c1 = arith.constant 1 : index
    %c0_8 = arith.constant 0 : index
    %c0_9 = arith.constant 0 : index
    %10 = vector.load %arg3[%c1, %c0_8, %c0_9] : memref<3x12x128xbf16, #tpu.memory_space<vmem>>, vector<1x12x128xbf16>
    %11 = vector.shape_cast %10 : vector<1x12x128xbf16> to vector<12x128xbf16>
    %cst_10 = arith.constant dense<0.000000e+00> : vector<256x128xf32>
    %12 = tpu.matmul %9, %11, %cst_10 {dimension_numbers = #tpu.dot_dimension_numbers<[1], [0], [0], [1], [0, 0, 1, 1], [], []>} : vector<256x12xbf16>, vector<12x128xbf16>, vector<256x128xf32> -> vector<256x128xf32>
    %13 = arith.addf %7, %12 : vector<256x128xf32>
    %14 = vector.extract_strided_slice %2 {offsets = [2, 0, 0], sizes = [16, 16, 12], strides = [1, 1, 1]} : vector<18x16x12xbf16> to vector<16x16x12xbf16>
    %15 = vector.shape_cast %14 : vector<16x16x12xbf16> to vector<256x12xbf16>
    %c2 = arith.constant 2 : index
    %c0_11 = arith.constant 0 : index
    %c0_12 = arith.constant 0 : index
    %16 = vector.load %arg3[%c2, %c0_11, %c0_12] : memref<3x12x128xbf16, #tpu.memory_space<vmem>>, vector<1x12x128xbf16>
    %17 = vector.shape_cast %16 : vector<1x12x128xbf16> to vector<12x128xbf16>
    %cst_13 = arith.constant dense<0.000000e+00> : vector<256x128xf32>
    %18 = tpu.matmul %15, %17, %cst_13 {dimension_numbers = #tpu.dot_dimension_numbers<[1], [0], [0], [1], [0, 0, 1, 1], [], []>} : vector<256x12xbf16>, vector<12x128xbf16>, vector<256x128xf32> -> vector<256x128xf32>
    %19 = arith.addf %13, %18 : vector<256x128xf32>
    %20 = vector.broadcast %0 : vector<1x128xf32> to vector<256x128xf32>
    %21 = arith.addf %19, %20 : vector<256x128xf32>
    %22 = arith.truncf %21 : vector<256x128xf32> to vector<256x128xbf16>
    %c0_14 = arith.constant 0 : index
    %c0_15 = arith.constant 0 : index
    %c0_16 = arith.constant 0 : index
    %23 = vector.load %arg5[%c0_14, %c0_15, %c0_16] : memref<1x256x128xbf16, #tpu.memory_space<vmem>>, vector<1x256x128xbf16>
    %24 = vector.shape_cast %23 : vector<1x256x128xbf16> to vector<256x128xbf16>
    %25 = vector.shape_cast %22 : vector<256x128xbf16> to vector<1x256x128xbf16>
    tpu.vector_store %arg5[%c0_14, %c0_15, %c0_16], %25 {strides = array<i32>} : memref<1x256x128xbf16, #tpu.memory_space<vmem>>, vector<1x256x128xbf16>,
    return
  }
  func.func @transform_0(%arg0: i32, %arg1: i32) -> (i32, i32, i32, i32) {
    %c0_i32 = arith.constant 0 : i32
    %c0_i32_0 = arith.constant 0 : i32
    %c0_i32_1 = arith.constant 0 : i32
    %c0_i32_2 = arith.constant 0 : i32
    return %arg0, %c0_i32, %c0_i32_0, %c0_i32_1 : i32, i32, i32, i32
  }
  func.func @transform_1(%arg0: i32, %arg1: i32) -> (i32, i32, i32) {
    %c0_i32 = arith.constant 0 : i32
    %c0_i32_0 = arith.constant 0 : i32
    %c0_i32_1 = arith.constant 0 : i32
    return %c0_i32, %c0_i32_0, %arg1 : i32, i32, i32
  }
  func.func @transform_2(%arg0: i32, %arg1: i32) -> (i32, i32) {
    %c0_i32 = arith.constant 0 : i32
    %c0_i32_0 = arith.constant 0 : i32
    return %c0_i32, %arg1 : i32, i32
  }
  func.func @transform_3(%arg0: i32, %arg1: i32) -> (i32, i32, i32) {
    %c0_i32 = arith.constant 0 : i32
    %c0_i32_0 = arith.constant 0 : i32
    return %arg0, %c0_i32, %arg1 : i32, i32, i32
  }
}

</mosaic_0001>

<llo_original>
// kernel: meta_conv2d_forward.1
$region0: #{meta_conv2d_forward.1}
  #allocation0 [shape = 'u32[]', space=smem, size = 0x4, offset = 0x4, fixed_abs, tag = 'smem constant byte address 0x4 - core index']
  #allocation1 [shape = 'u32[72,128]{1,0:T(1,128)}', space=vmem, size = 0x9000, scoped, tag = 'internal scratch']
  %s0 = inlined_call_operand.vmem [shape: bf16[2,18,16,12], index: 0, kind: input, shape index: {}]
  %s1 = inlined_call_operand.vmem [shape: bf16[3,12,128], index: 1, kind: input, shape index: {}]
  %s2 = inlined_call_operand.vmem [shape: f32[1,128], index: 2, kind: input, shape index: {}]
  %s3 = inlined_call_operand.vmem [shape: bf16[2,256,128], index: 3, kind: output, shape index: {}]
  %s4 = sld [smem:[#allocation0]]
  $region45: #{meta_conv2d_forward.1} parent=0
    _
  %s6 = ssub.s32 1, %s4
  %s7 = scalar_select 0, %s6, %s4
  loop: start=0, step=1, limit=4
  $region2: #{meta_conv2d_forward.1} parent=0 // loop_pre_header
    _
  $region3: #{meta_conv2d_forward.1} parent=0 // loop_header
    %s9 = sphi 0, %s13
    %p10 = scmp.ge.s32.totalorder %s9, 4
    %s16 = sphi 0, %s28
    %s17 = sphi 0, %s24
    %s18 = sphi 0, %s16
    %s19 = sphi 0, %s17
    %s20 = sphi 0, %s18
    %s21 = sphi 0, %s19
    %s31 = sphi 0, %s33
    %s34 = sphi 0, %s31
    %s35 = sphi 0, %s34
    %s51 = sphi 0, %s35
    %s57 = sphi 0, %s59
    %s60 = sphi 0, %s57
    %s61 = sphi 0, %s60
    %s77 = sphi 0, %s61
    %s83 = sphi 0, %s85
    %s86 = sphi 0, %s83
    %s87 = sphi 0, %s86
    %s103 = sphi 0, %s87
    %s111 = sphi 0, %s113
    %s114 = sphi 0, %s111
    %s115 = sphi 0, %s114
    %s131 = sphi 0, %s115
  $region4: #{meta_conv2d_forward.1} parent=0 // loop_header_branch
    %12 = sbr.rel (%p10) target = $region8
  $region5: #{meta_conv2d_forward.1} parent=0 // loop_body
    %s14 = ssub.s32 %s9, 1
    %s15 = ssub.s32 %s9, 2
    %s22 = sadd.s32 1, %s17
    %p23 = scmp.ge.s32.totalorder %s22, 1
    %s24 = scalar_select %p23, 0, %s22
    %s25 = sadd.s32 1, %s16
    %s26 = scalar_select %p23, %s25, %s16
    %p27 = scmp.ge.s32.totalorder %s26, 2
    %s28 = scalar_select %p27, 0, %s26
    %s29 = ssub.s32 %s16, %s28
    %p30 = scmp.eq.s32.totalorder %s29, 0
    %s32 = sadd.s32 %s31, 1
    %s33 = scalar_select %p30, %s31, %s32
    %p36 = pneg %p30
    %p37 = scmp.eq.s32.totalorder %s9, 1
    %p38 = por %p36, %p37
    %p39 = scmp.ne.s32.totalorder %s31, %s34
    %p40 = scmp.eq.s32.totalorder %s9, 0
    %p41 = por %p39, %p40
    %p42 = scmp.ne.s32.totalorder %s31, %s34
    %p43 = scmp.eq.s32.totalorder %s14, 1
    %p44 = por %p42, %p43
    %p45 = scmp.ne.s32.totalorder %s34, %s35
    %p46 = scmp.eq.s32.totalorder %s14, 0
    %p47 = por %p45, %p46
    %p48 = scmp.ne.s32.totalorder %s34, %s35
    %p49 = scmp.eq.s32.totalorder %s15, 1
    %p50 = por %p48, %p49
    %p52 = scmp.ne.s32.totalorder %s35, %s51
    %p53 = scmp.eq.s32.totalorder %s15, 0
    %p54 = por %p52, %p53
    %s55 = ssub.s32 %s17, %s24
    %p56 = scmp.eq.s32.totalorder %s55, 0
    %s58 = sadd.s32 %s57, 1
    %s59 = scalar_select %p56, %s57, %s58
    %p62 = pneg %p56
    %p63 = scmp.eq.s32.totalorder %s9, 1
    %p64 = por %p62, %p63
    %p65 = scmp.ne.s32.totalorder %s57, %s60
    %p66 = scmp.eq.s32.totalorder %s9, 0
    %p67 = por %p65, %p66
    %p68 = scmp.ne.s32.totalorder %s57, %s60
    %p69 = scmp.eq.s32.totalorder %s14, 1
    %p70 = por %p68, %p69
    %p71 = scmp.ne.s32.totalorder %s60, %s61
    %p72 = scmp.eq.s32.totalorder %s14, 0
    %p73 = por %p71, %p72
    %p74 = scmp.ne.s32.totalorder %s60, %s61
    %p75 = scmp.eq.s32.totalorder %s15, 1
    %p76 = por %p74, %p75
    %p78 = scmp.ne.s32.totalorder %s61, %s77
    %p79 = scmp.eq.s32.totalorder %s15, 0
    %p80 = por %p78, %p79
    %s81 = ssub.s32 %s17, %s24
    %p82 = scmp.eq.s32.totalorder %s81, 0
    %s84 = sadd.s32 %s83, 1
    %s85 = scalar_select %p82, %s83, %s84
    %p88 = pneg %p82
    %p89 = scmp.eq.s32.totalorder %s9, 1
    %p90 = por %p88, %p89
    %p91 = scmp.ne.s32.totalorder %s83, %s86
    %p92 = scmp.eq.s32.totalorder %s9, 0
    %p93 = por %p91, %p92
    %p94 = scmp.ne.s32.totalorder %s83, %s86
    %p95 = scmp.eq.s32.totalorder %s14, 1
    %p96 = por %p94, %p95
    %p97 = scmp.ne.s32.totalorder %s86, %s87
    %p98 = scmp.eq.s32.totalorder %s14, 0
    %p99 = por %p97, %p98
    %p100 = scmp.ne.s32.totalorder %s86, %s87
    %p101 = scmp.eq.s32.totalorder %s15, 1
    %p102 = por %p100, %p101
    %p104 = scmp.ne.s32.totalorder %s87, %s103
    %p105 = scmp.eq.s32.totalorder %s15, 0
    %p106 = por %p104, %p105
    %s107 = ssub.s32 %s16, %s28
    %s108 = ssub.s32 %s17, %s24
    %s109 = sor.u32 %s107, %s108
    %p110 = scmp.eq.s32.totalorder %s109, 0
    %s112 = sadd.s32 %s111, 1
    %s113 = scalar_select %p110, %s111, %s112
    %p116 = pneg %p110
    %p117 = scmp.eq.s32.totalorder %s9, 1
    %p118 = por %p116, %p117
    %p119 = scmp.ne.s32.totalorder %s111, %s114
    %p120 = scmp.eq.s32.totalorder %s9, 0
    %p121 = por %p119, %p120
    %p122 = scmp.ne.s32.totalorder %s111, %s114
    %p123 = scmp.eq.s32.totalorder %s14, 1
    %p124 = por %p122, %p123
    %p125 = scmp.ne.s32.totalorder %s114, %s115
    %p126 = scmp.eq.s32.totalorder %s14, 0
    %p127 = por %p125, %p126
    %p128 = scmp.ne.s32.totalorder %s114, %s115
    %p129 = scmp.eq.s32.totalorder %s15, 1
    %p130 = por %p128, %p129
    %p132 = scmp.ne.s32.totalorder %s115, %s131
    %p133 = scmp.eq.s32.totalorder %s15, 0
    %p134 = por %p132, %p133
    %p135 = scmp.le.s32.totalorder 1, %s9
    %p136 = scmp.lt.s32.totalorder %s9, 3
    %p137 = pnand %p135, %p136
    %p138 = pneg %p137
    // Predicated region
    $region9: #{meta_conv2d_forward.1} parent=5 // pred_check
      _
    $region10: #{meta_conv2d_forward.1} parent=5 // pred_check_branch
      %140 = sbr.rel (%p137) target = $region12
    $region11: #{meta_conv2d_forward.1} parent=5 // pred_region
      %s141 = ssub.s32 %s9, 1
      // Predicated region
      $region13: #{meta_conv2d_forward.1} parent=11 // pred_check
        %p142 = pneg %p73
      $region14: #{meta_conv2d_forward.1} parent=11 // pred_check_branch
        %144 = sbr.rel (%p142) target = $region16
      $region15: #{meta_conv2d_forward.1} parent=11 // pred_region
        %p145 = scmp.lt.s32.totalorder %s19, 0
        %s146 = scalar_select %p145, %s19, 0
        %s147 = smul.addr %s146, 4
        %s148 = scalar_lea.vmem %s1, %s147
      $region16: #{meta_conv2d_forward.1} parent=11 // pred_fallthru
        _
      // Predicated region
      $region17: #{meta_conv2d_forward.1} parent=11 // pred_check
        %p149 = pneg %p99
      $region18: #{meta_conv2d_forward.1} parent=11 // pred_check_branch
        %151 = sbr.rel (%p149) target = $region20
      $region19: #{meta_conv2d_forward.1} parent=11 // pred_region
        %p152 = scmp.lt.s32.totalorder %s19, 0
        %s153 = scalar_select %p152, %s19, 0
        %s154 = scalar_lea.vmem %s2, %s153
      $region20: #{meta_conv2d_forward.1} parent=11 // pred_fallthru
        _
    $region12: #{meta_conv2d_forward.1} parent=5 // pred_fallthru
      _
    %p155 = scmp.lt.s32.totalorder %s9, 2
    // Predicated region
    $region21: #{meta_conv2d_forward.1} parent=5 // pred_check
      %p156 = pneg %p155
    $region22: #{meta_conv2d_forward.1} parent=5 // pred_check_branch
      %158 = sbr.rel (%p156) target = $region24
    $region23: #{meta_conv2d_forward.1} parent=5 // pred_region
      // Predicated region
      $region25: #{meta_conv2d_forward.1} parent=23 // pred_check
        %p159 = pneg %p41
      $region26: #{meta_conv2d_forward.1} parent=23 // pred_check_branch
        %161 = sbr.rel (%p159) target = $region28
      $region27: #{meta_conv2d_forward.1} parent=23 // pred_region
        %p162 = scmp.lt.s32.totalorder %s16, 1
        %s163 = scalar_select %p162, %s16, 1
        %s164 = smul.addr %s163, 36
        %s165 = smul.addr %s164, 4
        %s166 = scalar_lea.vmem %s0, %s165
      $region28: #{meta_conv2d_forward.1} parent=23 // pred_fallthru
        _
    $region24: #{meta_conv2d_forward.1} parent=5 // pred_fallthru
      _
    %p167 = scmp.le.s32.totalorder 1, %s9
    %p168 = scmp.lt.s32.totalorder %s9, 3
    %p169 = pnand %p167, %p168
    %p170 = pneg %p169
    // Predicated region
    $region29: #{meta_conv2d_forward.1} parent=5 // pred_check
      _
    $region30: #{meta_conv2d_forward.1} parent=5 // pred_check_branch
      %172 = sbr.rel (%p169) target = $region32
    $region31: #{meta_conv2d_forward.1} parent=5 // pred_region
      %s173 = ssub.s32 %s9, 1
      %p174 = scmp.lt.s32.totalorder %s18, 1
      %s175 = scalar_select %p174, %s18, 1
      %s176 = smul.addr %s175, 36
      %s177 = smul.addr %s176, 4
      %s178 = scalar_lea.vmem %s0, %s177
      %p179 = pneg %p47
      %p180 = pneg %p44
      %p181 = scmp.lt.s32.totalorder %s19, 0
      %s182 = scalar_select %p181, %s19, 0
      %s183 = smul.addr %s182, 4
      %s184 = scalar_lea.vmem %s1, %s183
      %p185 = pneg %p73
      %p186 = pneg %p70
      %p187 = scmp.lt.s32.totalorder %s19, 0
      %s188 = scalar_select %p187, %s19, 0
      %s189 = scalar_lea.vmem %s2, %s188
      %p190 = pneg %p99
      %p191 = pneg %p96
      %p192 = pneg %p127
      %p193 = pneg %p124
      %p194 = scmp.lt.s32.totalorder %s18, 1
      %s195 = scalar_select %p194, %s18, 1
      %p196 = scmp.lt.s32.totalorder %s19, 0
      %s197 = scalar_select %p196, %s19, 0
      %s198 = smul.addr %s195, 32
      %s199 = sadd.s32 %s197, %s198
      %s200 = smul.addr %s199, 4
      %s201 = scalar_lea.vmem %s3, %s200
      %p202 = scmp.lt.s32.totalorder %s18, 1
      %s203 = scalar_select %p202, %s18, 1
      %s204 = smul.addr %s203, 36
      %s205 = smul.addr %s204, 4
      %s206 = scalar_lea.vmem %s0, %s205
      %p207 = scmp.lt.s32.totalorder %s19, 0
      %s208 = scalar_select %p207, %s19, 0
      %s209 = smul.addr %s208, 4
      %s210 = scalar_lea.vmem %s1, %s209
      %p211 = scmp.lt.s32.totalorder %s19, 0
      %s212 = scalar_select %p211, %s19, 0
      %s213 = scalar_lea.vmem %s2, %s212
      %p214 = scmp.lt.s32.totalorder %s18, 1
      %s215 = scalar_select %p214, %s18, 1
      %p216 = scmp.lt.s32.totalorder %s19, 0
      %s217 = scalar_select %p216, %s19, 0
      %s218 = smul.addr %s215, 32
      %s219 = sadd.s32 %s217, %s218
      %s220 = smul.addr %s219, 4
      %s221 = scalar_lea.vmem %s3, %s220
      %v223 = vld [vmem:[%s213] sm:$0x1]
      %v224 = vld [vmem:[%s206] sm:$0xf]
      %v225 = vld [vmem:[%s206 + $0x4] sm:$0xf]
      %v226 = vld [vmem:[%s206 + $0x8] sm:$0xf]
      %v227 = vld [vmem:[%s206 + $0xc] sm:$0xf]
      %v228 = vld [vmem:[%s206 + $0x10] sm:$0xf]
      %v229 = vld [vmem:[%s206 + $0x14] sm:$0xf]
      %v230 = vld [vmem:[%s206 + $0x18] sm:$0xf]
      %v231 = vld [vmem:[%s206 + $0x1c] sm:$0xf]
      %v232 = vld [vmem:[%s206 + $0x20] sm:$0xf]
      %v233 = vld [vmem:[%s206 + $0x24] sm:$0xf]
      %v234 = vld [vmem:[%s206 + $0x28] sm:$0xf]
      %v235 = vld [vmem:[%s206 + $0x2c] sm:$0xf]
      %v236 = vld [vmem:[%s206 + $0x30] sm:$0xf]
      %v237 = vld [vmem:[%s206 + $0x34] sm:$0xf]
      %v238 = vld [vmem:[%s206 + $0x38] sm:$0xf]
      %v239 = vld [vmem:[%s206 + $0x3c] sm:$0xf]
      %v240 = vld [vmem:[%s206 + $0x40] sm:$0xf]
      %v241 = vld [vmem:[%s206 + $0x44] sm:$0xf]
      %v242 = vld [vmem:[%s206 + $0x48] sm:$0xf]
      %v243 = vld [vmem:[%s206 + $0x4c] sm:$0xf]
      %v244 = vld [vmem:[%s206 + $0x50] sm:$0xf]
      %v245 = vld [vmem:[%s206 + $0x54] sm:$0xf]
      %v246 = vld [vmem:[%s206 + $0x58] sm:$0xf]
      %v247 = vld [vmem:[%s206 + $0x5c] sm:$0xf]
      %v248 = vld [vmem:[%s206 + $0x60] sm:$0xf]
      %v249 = vld [vmem:[%s206 + $0x64] sm:$0xf]
      %v250 = vld [vmem:[%s206 + $0x68] sm:$0xf]
      %v251 = vld [vmem:[%s206 + $0x6c] sm:$0xf]
      %v252 = vld [vmem:[%s206 + $0x70] sm:$0xf]
      %v253 = vld [vmem:[%s206 + $0x74] sm:$0xf]
      %v254 = vld [vmem:[%s206 + $0x78] sm:$0xf]
      %v255 = vld [vmem:[%s206 + $0x7c] sm:$0xf]
      %v256 = vld [vmem:[%s206 + $0x80] sm:$0xf]
      %v257 = vld [vmem:[%s206 + $0x84] sm:$0xf]
      %v258 = vld [vmem:[%s206 + $0x88] sm:$0xf]
      %v259 = vld [vmem:[%s206 + $0x8c] sm:$0xf]
      %v260 = vld [vmem:[%s210] sm:$0xf]
      %v261 = vld [vmem:[%s210 + $0x4] sm:$0x3]
      %s262 = scalar_lea.vmem %s210, 8
      %v263 = vld [vmem:[%s262] sm:$0xf]
      %v264 = vld [vmem:[%s262 + $0x4] sm:$0x3]
      %v297 = vunpack.c.l.b16 %v226
      %v298 = vunpack.c.l.b16 %v227
      %v299 = vunpack.c.l.b16 %v228
      %v300 = vunpack.c.l.b16 %v229
      %v301 = vunpack.c.l.b16 %v230
      %v302 = vunpack.c.l.b16 %v231
      %v303 = vunpack.c.l.b16 %v232
      %v304 = vunpack.c.l.b16 %v233
      %v305 = vunpack.c.l.b16 %v234
      %v306 = vunpack.c.l.b16 %v235
      %v307 = vunpack.c.l.b16 %v236
      %v308 = vunpack.c.l.b16 %v237
      %v309 = vunpack.c.l.b16 %v238
      %v310 = vunpack.c.l.b16 %v239
      %v311 = vunpack.c.l.b16 %v240
      %v312 = vunpack.c.l.b16 %v241
      %v313 = vunpack.c.l.b16 %v242
      %v314 = vunpack.c.l.b16 %v243
      %v315 = vunpack.c.l.b16 %v244
      %v316 = vunpack.c.l.b16 %v245
      %v317 = vunpack.c.l.b16 %v246
      %v318 = vunpack.c.l.b16 %v247
      %v319 = vunpack.c.l.b16 %v248
      %v320 = vunpack.c.l.b16 %v249
      %v321 = vunpack.c.l.b16 %v250
      %v322 = vunpack.c.l.b16 %v251
      %v323 = vunpack.c.l.b16 %v252
      %v324 = vunpack.c.l.b16 %v253
      %v325 = vunpack.c.l.b16 %v254
      %v326 = vunpack.c.l.b16 %v255
      %v327 = vunpack.c.l.b16 %v256
      %v328 = vunpack.c.l.b16 %v257
      %v329 = vpack.c.b16 %v298, %v297
      %v330 = vpack.c.b16 %v300, %v299
      %v331 = vpack.c.b16 %v302, %v301
      %v332 = vpack.c.b16 %v304, %v303
      %v333 = vpack.c.b16 %v306, %v305
      %v334 = vpack.c.b16 %v308, %v307
      %v335 = vpack.c.b16 %v310, %v309
      %v336 = vpack.c.b16 %v312, %v311
      %v337 = vpack.c.b16 %v314, %v313
      %v338 = vpack.c.b16 %v316, %v315
      %v339 = vpack.c.b16 %v318, %v317
      %v340 = vpack.c.b16 %v320, %v319
      %v341 = vpack.c.b16 %v322, %v321
      %v342 = vpack.c.b16 %v324, %v323
      %v343 = vpack.c.b16 %v326, %v325
      %v344 = vpack.c.b16 %v328, %v327
      %v347 = vunpack.c.l.b16 %v263
      %v348 = vunpack.c.l.b16 %v264
      %v349 = vpack.c.b16 %v348, %v347
      %vm350 = vcmask 97280
      %v352 = vsel %vm350, %v329, 0
      %v355 = vsel %vm350, %v330, 0
      %v358 = vsel %vm350, %v331, 0
      %v361 = vsel %vm350, %v332, 0
      %v364 = vsel %vm350, %v333, 0
      %v367 = vsel %vm350, %v334, 0
      %v370 = vsel %vm350, %v335, 0
      %v373 = vsel %vm350, %v336, 0
      %v376 = vsel %vm350, %v337, 0
      %v379 = vsel %vm350, %v338, 0
      %v382 = vsel %vm350, %v339, 0
      %v385 = vsel %vm350, %v340, 0
      %v388 = vsel %vm350, %v341, 0
      %v391 = vsel %vm350, %v342, 0
      %v394 = vsel %vm350, %v343, 0
      %v397 = vsel %vm350, %v344, 0
      %vm399 = vcmask 1045504
      %v401 = vsel %vm399, %v349, 0
      %403 = vmatpush.bf16.msra.mxu0 0
      %404 = vmatpush.bf16.msra.mxu0 0
      %405 = vmatpush.bf16.msra.mxu0 0
      %406 = vmatpush.bf16.msra.mxu0 0
      %407 = vmatpush.bf16.msra.mxu0 0
      %408 = vmatpush.bf16.msra.mxu0 0
      %409 = vmatpush.bf16.msra.mxu0 0
      %410 = vmatpush.bf16.msra.mxu0 %v401
      %411 = vmatmul.bf16.gmra.mxu0 %v352
      %v412 = vpop.f32.mrf.mxu0
      %v413 = vadd.f32 0.0, %v412
      %v414 = vpop.f32.mrf.mxu0
      %v415 = vadd.f32 0.0, %v414
      %416 = vmatmul.bf16.gmra.mxu0 %v355
      %v417 = vpop.f32.mrf.mxu0
      %v418 = vadd.f32 0.0, %v417
      %v419 = vpop.f32.mrf.mxu0
      %v420 = vadd.f32 0.0, %v419
      %421 = vmatmul.bf16.gmra.mxu0 %v358
      %v422 = vpop.f32.mrf.mxu0
      %v423 = vadd.f32 0.0, %v422
      %v424 = vpop.f32.mrf.mxu0
      %v425 = vadd.f32 0.0, %v424
      %426 = vmatmul.bf16.gmra.mxu0 %v361
      %v427 = vpop.f32.mrf.mxu0
      %v428 = vadd.f32 0.0, %v427
      %v429 = vpop.f32.mrf.mxu0
      %v430 = vadd.f32 0.0, %v429
      %431 = vmatmul.bf16.gmra.mxu0 %v364
      %v432 = vpop.f32.mrf.mxu0
      %v433 = vadd.f32 0.0, %v432
      %v434 = vpop.f32.mrf.mxu0
      %v435 = vadd.f32 0.0, %v434
      %436 = vmatmul.bf16.gmra.mxu0 %v367
      %v437 = vpop.f32.mrf.mxu0
      %v438 = vadd.f32 0.0, %v437
      %v439 = vpop.f32.mrf.mxu0
      %v440 = vadd.f32 0.0, %v439
      %441 = vmatmul.bf16.gmra.mxu0 %v370
      %v442 = vpop.f32.mrf.mxu0
      %v443 = vadd.f32 0.0, %v442
      %v444 = vpop.f32.mrf.mxu0
      %v445 = vadd.f32 0.0, %v444
      %446 = vmatmul.bf16.gmra.mxu0 %v373
      %v447 = vpop.f32.mrf.mxu0
      %v448 = vadd.f32 0.0, %v447
      %v449 = vpop.f32.mrf.mxu0
      %v450 = vadd.f32 0.0, %v449
      %451 = vmatmul.bf16.gmra.mxu0 %v376
      %v452 = vpop.f32.mrf.mxu0
      %v453 = vadd.f32 0.0, %v452
      %v454 = vpop.f32.mrf.mxu0
      %v455 = vadd.f32 0.0, %v454
      %456 = vmatmul.bf16.gmra.mxu0 %v379
      %v457 = vpop.f32.mrf.mxu0
      %v458 = vadd.f32 0.0, %v457
      %v459 = vpop.f32.mrf.mxu0
      %v460 = vadd.f32 0.0, %v459
      %461 = vmatmul.bf16.gmra.mxu0 %v382
      %v462 = vpop.f32.mrf.mxu0
      %v463 = vadd.f32 0.0, %v462
      %v464 = vpop.f32.mrf.mxu0
      %v465 = vadd.f32 0.0, %v464
      %466 = vmatmul.bf16.gmra.mxu0 %v385
      %v467 = vpop.f32.mrf.mxu0
      %v468 = vadd.f32 0.0, %v467
      %v469 = vpop.f32.mrf.mxu0
      %v470 = vadd.f32 0.0, %v469
      %471 = vmatmul.bf16.gmra.mxu0 %v388
      %v472 = vpop.f32.mrf.mxu0
      %v473 = vadd.f32 0.0, %v472
      %v474 = vpop.f32.mrf.mxu0
      %v475 = vadd.f32 0.0, %v474
      %476 = vmatmul.bf16.gmra.mxu0 %v391
      %v477 = vpop.f32.mrf.mxu0
      %v478 = vadd.f32 0.0, %v477
      %v479 = vpop.f32.mrf.mxu0
      %v480 = vadd.f32 0.0, %v479
      %481 = vmatmul.bf16.gmra.mxu0 %v394
      %v482 = vpop.f32.mrf.mxu0
      %v483 = vadd.f32 0.0, %v482
      %v484 = vpop.f32.mrf.mxu0
      %v485 = vadd.f32 0.0, %v484
      %486 = vmatmul.bf16.gmra.mxu0 %v397
      %v487 = vpop.f32.mrf.mxu0
      %v488 = vadd.f32 0.0, %v487
      %v489 = vpop.f32.mrf.mxu0
      %v490 = vadd.f32 0.0, %v489
      %491 = vdwg.mxu0
      %v494 = vunpack.c.l.b16 %v224
      %v495 = vunpack.c.l.b16 %v225
      %v496 = vpack.c.b16 %v495, %v494
      %v499 = vunpack.c.l.b16 %v260
      %v500 = vunpack.c.l.b16 %v261
      %v501 = vpack.c.b16 %v500, %v499
      %v503 = vsel %vm350, %v496, 0
      %v506 = vsel %vm399, %v501, 0
      %508 = vmatpush.bf16.msra.mxu0 0
      %509 = vmatpush.bf16.msra.mxu0 0
      %510 = vmatpush.bf16.msra.mxu0 0
      %511 = vmatpush.bf16.msra.mxu0 0
      %512 = vmatpush.bf16.msra.mxu0 0
      %513 = vmatpush.bf16.msra.mxu0 0
      %514 = vmatpush.bf16.msra.mxu0 0
      %515 = vmatpush.bf16.msra.mxu0 %v506
      %516 = vmatmul.bf16.gmra.mxu0 %v503
      %v517 = vpop.f32.mrf.mxu0
      %v518 = vadd.f32 %v413, %v517
      %v519 = vpop.f32.mrf.mxu0
      %v520 = vadd.f32 %v415, %v519
      %521 = vmatmul.bf16.gmra.mxu0 %v352
      %v522 = vpop.f32.mrf.mxu0
      %v523 = vadd.f32 %v418, %v522
      %v524 = vpop.f32.mrf.mxu0
      %v525 = vadd.f32 %v420, %v524
      %526 = vmatmul.bf16.gmra.mxu0 %v355
      %v527 = vpop.f32.mrf.mxu0
      %v528 = vadd.f32 %v423, %v527
      %v529 = vpop.f32.mrf.mxu0
      %v530 = vadd.f32 %v425, %v529
      %531 = vmatmul.bf16.gmra.mxu0 %v358
      %v532 = vpop.f32.mrf.mxu0
      %v533 = vadd.f32 %v428, %v532
      %v534 = vpop.f32.mrf.mxu0
      %v535 = vadd.f32 %v430, %v534
      %536 = vmatmul.bf16.gmra.mxu0 %v361
      %v537 = vpop.f32.mrf.mxu0
      %v538 = vadd.f32 %v433, %v537
      %v539 = vpop.f32.mrf.mxu0
      %v540 = vadd.f32 %v435, %v539
      %541 = vmatmul.bf16.gmra.mxu0 %v364
      %v542 = vpop.f32.mrf.mxu0
      %v543 = vadd.f32 %v438, %v542
      %v544 = vpop.f32.mrf.mxu0
      %v545 = vadd.f32 %v440, %v544
      %546 = vmatmul.bf16.gmra.mxu0 %v367
      %v547 = vpop.f32.mrf.mxu0
      %v548 = vadd.f32 %v443, %v547
      %v549 = vpop.f32.mrf.mxu0
      %v550 = vadd.f32 %v445, %v549
      %551 = vmatmul.bf16.gmra.mxu0 %v370
      %v552 = vpop.f32.mrf.mxu0
      %v553 = vadd.f32 %v448, %v552
      %v554 = vpop.f32.mrf.mxu0
      %v555 = vadd.f32 %v450, %v554
      %556 = vmatmul.bf16.gmra.mxu0 %v373
      %v557 = vpop.f32.mrf.mxu0
      %v558 = vadd.f32 %v453, %v557
      %v559 = vpop.f32.mrf.mxu0
      %v560 = vadd.f32 %v455, %v559
      %561 = vmatmul.bf16.gmra.mxu0 %v376
      %v562 = vpop.f32.mrf.mxu0
      %v563 = vadd.f32 %v458, %v562
      %v564 = vpop.f32.mrf.mxu0
      %v565 = vadd.f32 %v460, %v564
      %566 = vmatmul.bf16.gmra.mxu0 %v379
      %v567 = vpop.f32.mrf.mxu0
      %v568 = vadd.f32 %v463, %v567
      %v569 = vpop.f32.mrf.mxu0
      %v570 = vadd.f32 %v465, %v569
      %571 = vmatmul.bf16.gmra.mxu0 %v382
      %v572 = vpop.f32.mrf.mxu0
      %v573 = vadd.f32 %v468, %v572
      %v574 = vpop.f32.mrf.mxu0
      %v575 = vadd.f32 %v470, %v574
      %576 = vmatmul.bf16.gmra.mxu0 %v385
      %v577 = vpop.f32.mrf.mxu0
      %v578 = vadd.f32 %v473, %v577
      %v579 = vpop.f32.mrf.mxu0
      %v580 = vadd.f32 %v475, %v579
      %581 = vmatmul.bf16.gmra.mxu0 %v388
      %v582 = vpop.f32.mrf.mxu0
      %v583 = vadd.f32 %v478, %v582
      %v584 = vpop.f32.mrf.mxu0
      %v585 = vadd.f32 %v480, %v584
      %586 = vmatmul.bf16.gmra.mxu0 %v391
      %v587 = vpop.f32.mrf.mxu0
      %v588 = vadd.f32 %v483, %v587
      %v589 = vpop.f32.mrf.mxu0
      %v590 = vadd.f32 %v485, %v589
      %591 = vmatmul.bf16.gmra.mxu0 %v394
      %v592 = vpop.f32.mrf.mxu0
      %v593 = vadd.f32 %v488, %v592
      %v594 = vpop.f32.mrf.mxu0
      %v595 = vadd.f32 %v490, %v594
      %596 = vdwg.mxu0
      %s597 = scalar_lea.vmem %s210, 16
      %v598 = vld [vmem:[%s597] sm:$0xf]
      %v599 = vld [vmem:[%s597 + $0x4] sm:$0x3]
      %v602 = vunpack.c.l.b16 %v258
      %v603 = vunpack.c.l.b16 %v259
      %v604 = vpack.c.b16 %v603, %v602
      %v607 = vunpack.c.l.b16 %v598
      %v608 = vunpack.c.l.b16 %v599
      %v609 = vpack.c.b16 %v608, %v607
      %v611 = vsel %vm350, %v604, 0
      %v614 = vsel %vm399, %v609, 0
      %616 = vmatpush.bf16.msra.mxu0 0
      %617 = vmatpush.bf16.msra.mxu0 0
      %618 = vmatpush.bf16.msra.mxu0 0
      %619 = vmatpush.bf16.msra.mxu0 0
      %620 = vmatpush.bf16.msra.mxu0 0
      %621 = vmatpush.bf16.msra.mxu0 0
      %622 = vmatpush.bf16.msra.mxu0 0
      %623 = vmatpush.bf16.msra.mxu0 %v614
      %624 = vmatmul.bf16.gmra.mxu0 %v355
      %v625 = vpop.f32.mrf.mxu0
      %v626 = vadd.f32 0.0, %v625
      %v627 = vpop.f32.mrf.mxu0
      %v628 = vadd.f32 0.0, %v627
      %629 = vmatmul.bf16.gmra.mxu0 %v358
      %v630 = vpop.f32.mrf.mxu0
      %v631 = vadd.f32 0.0, %v630
      %v632 = vpop.f32.mrf.mxu0
      %v633 = vadd.f32 0.0, %v632
      %634 = vmatmul.bf16.gmra.mxu0 %v361
      %v635 = vpop.f32.mrf.mxu0
      %v636 = vadd.f32 0.0, %v635
      %v637 = vpop.f32.mrf.mxu0
      %v638 = vadd.f32 0.0, %v637
      %639 = vmatmul.bf16.gmra.mxu0 %v364
      %v640 = vpop.f32.mrf.mxu0
      %v641 = vadd.f32 0.0, %v640
      %v642 = vpop.f32.mrf.mxu0
      %v643 = vadd.f32 0.0, %v642
      %644 = vmatmul.bf16.gmra.mxu0 %v367
      %v645 = vpop.f32.mrf.mxu0
      %v646 = vadd.f32 0.0, %v645
      %v647 = vpop.f32.mrf.mxu0
      %v648 = vadd.f32 0.0, %v647
      %649 = vmatmul.bf16.gmra.mxu0 %v370
      %v650 = vpop.f32.mrf.mxu0
      %v651 = vadd.f32 0.0, %v650
      %v652 = vpop.f32.mrf.mxu0
      %v653 = vadd.f32 0.0, %v652
      %654 = vmatmul.bf16.gmra.mxu0 %v373
      %v655 = vpop.f32.mrf.mxu0
      %v656 = vadd.f32 0.0, %v655
      %v657 = vpop.f32.mrf.mxu0
      %v658 = vadd.f32 0.0, %v657
      %659 = vmatmul.bf16.gmra.mxu0 %v376
      %v660 = vpop.f32.mrf.mxu0
      %v661 = vadd.f32 0.0, %v660
      %v662 = vpop.f32.mrf.mxu0
      %v663 = vadd.f32 0.0, %v662
      %664 = vmatmul.bf16.gmra.mxu0 %v379
      %v665 = vpop.f32.mrf.mxu0
      %v666 = vadd.f32 0.0, %v665
      %v667 = vpop.f32.mrf.mxu0
      %v668 = vadd.f32 0.0, %v667
      %669 = vmatmul.bf16.gmra.mxu0 %v382
      %v670 = vpop.f32.mrf.mxu0
      %v671 = vadd.f32 0.0, %v670
      %v672 = vpop.f32.mrf.mxu0
      %v673 = vadd.f32 0.0, %v672
      %674 = vmatmul.bf16.gmra.mxu0 %v385
      %v675 = vpop.f32.mrf.mxu0
      %v676 = vadd.f32 0.0, %v675
      %v677 = vpop.f32.mrf.mxu0
      %v678 = vadd.f32 0.0, %v677
      %679 = vmatmul.bf16.gmra.mxu0 %v388
      %v680 = vpop.f32.mrf.mxu0
      %v681 = vadd.f32 0.0, %v680
      %v682 = vpop.f32.mrf.mxu0
      %v683 = vadd.f32 0.0, %v682
      %684 = vmatmul.bf16.gmra.mxu0 %v391
      %v685 = vpop.f32.mrf.mxu0
      %v686 = vadd.f32 0.0, %v685
      %v687 = vpop.f32.mrf.mxu0
      %v688 = vadd.f32 0.0, %v687
      %689 = vmatmul.bf16.gmra.mxu0 %v394
      %v690 = vpop.f32.mrf.mxu0
      %v691 = vadd.f32 0.0, %v690
      %v692 = vpop.f32.mrf.mxu0
      %v693 = vadd.f32 0.0, %v692
      %694 = vmatmul.bf16.gmra.mxu0 %v397
      %v695 = vpop.f32.mrf.mxu0
      %v696 = vadd.f32 0.0, %v695
      %v697 = vpop.f32.mrf.mxu0
      %v698 = vadd.f32 0.0, %v697
      %699 = vmatmul.bf16.gmra.mxu0 %v611
      %v700 = vpop.f32.mrf.mxu0
      %v701 = vadd.f32 0.0, %v700
      %v702 = vpop.f32.mrf.mxu0
      %v703 = vadd.f32 0.0, %v702
      %704 = vdwg.mxu0
      %v705 = vadd.f32 %v518, %v626
      %v706 = vadd.f32 %v520, %v628
      %v707 = vadd.f32 %v523, %v631
      %v708 = vadd.f32 %v525, %v633
      %v709 = vadd.f32 %v528, %v636
      %v710 = vadd.f32 %v530, %v638
      %v711 = vadd.f32 %v533, %v641
      %v712 = vadd.f32 %v535, %v643
      %v713 = vadd.f32 %v538, %v646
      %v714 = vadd.f32 %v540, %v648
      %v715 = vadd.f32 %v543, %v651
      %v716 = vadd.f32 %v545, %v653
      %v717 = vadd.f32 %v548, %v656
      %v718 = vadd.f32 %v550, %v658
      %v719 = vadd.f32 %v553, %v661
      %v720 = vadd.f32 %v555, %v663
      %v721 = vadd.f32 %v558, %v666
      %v722 = vadd.f32 %v560, %v668
      %v723 = vadd.f32 %v563, %v671
      %v724 = vadd.f32 %v565, %v673
      %v725 = vadd.f32 %v568, %v676
      %v726 = vadd.f32 %v570, %v678
      %v727 = vadd.f32 %v573, %v681
      %v728 = vadd.f32 %v575, %v683
      %v729 = vadd.f32 %v578, %v686
      %v730 = vadd.f32 %v580, %v688
      %v731 = vadd.f32 %v583, %v691
      %v732 = vadd.f32 %v585, %v693
      %v733 = vadd.f32 %v588, %v696
      %v734 = vadd.f32 %v590, %v698
      %v735 = vadd.f32 %v593, %v701
      %v736 = vadd.f32 %v595, %v703
      %v738 = vperm.slane %v223, 0
      %v740 = vadd.f32 %v705, %v738
      %v741 = vadd.f32 %v706, %v738
      %v742 = vadd.f32 %v707, %v738
      %v743 = vadd.f32 %v708, %v738
      %v744 = vadd.f32 %v709, %v738
      %v745 = vadd.f32 %v710, %v738
      %v746 = vadd.f32 %v711, %v738
      %v747 = vadd.f32 %v712, %v738
      %v748 = vadd.f32 %v713, %v738
      %v749 = vadd.f32 %v714, %v738
      %v750 = vadd.f32 %v715, %v738
      %v751 = vadd.f32 %v716, %v738
      %v752 = vadd.f32 %v717, %v738
      %v753 = vadd.f32 %v718, %v738
      %v754 = vadd.f32 %v719, %v738
      %v755 = vadd.f32 %v720, %v738
      %v756 = vadd.f32 %v721, %v738
      %v757 = vadd.f32 %v722, %v738
      %v758 = vadd.f32 %v723, %v738
      %v759 = vadd.f32 %v724, %v738
      %v760 = vadd.f32 %v725, %v738
      %v761 = vadd.f32 %v726, %v738
      %v762 = vadd.f32 %v727, %v738
      %v763 = vadd.f32 %v728, %v738
      %v764 = vadd.f32 %v729, %v738
      %v765 = vadd.f32 %v730, %v738
      %v766 = vadd.f32 %v731, %v738
      %v767 = vadd.f32 %v732, %v738
      %v768 = vadd.f32 %v733, %v738
      %v769 = vadd.f32 %v734, %v738
      %v770 = vadd.f32 %v735, %v738
      %v771 = vadd.f32 %v736, %v738
      %v772 = vpack.c.bf16 %v740, %v740
      %v773 = vpack.c.bf16 %v741, %v741
      %v774 = vpack.c.bf16 %v742, %v742
      %v775 = vpack.c.bf16 %v743, %v743
      %v776 = vpack.c.bf16 %v744, %v744
      %v777 = vpack.c.bf16 %v745, %v745
      %v778 = vpack.c.bf16 %v746, %v746
      %v779 = vpack.c.bf16 %v747, %v747
      %v780 = vpack.c.bf16 %v748, %v748
      %v781 = vpack.c.bf16 %v749, %v749
      %v782 = vpack.c.bf16 %v750, %v750
      %v783 = vpack.c.bf16 %v751, %v751
      %v784 = vpack.c.bf16 %v752, %v752
      %v785 = vpack.c.bf16 %v753, %v753
      %v786 = vpack.c.bf16 %v754, %v754
      %v787 = vpack.c.bf16 %v755, %v755
      %v788 = vpack.c.bf16 %v756, %v756
      %v789 = vpack.c.bf16 %v757, %v757
      %v790 = vpack.c.bf16 %v758, %v758
      %v791 = vpack.c.bf16 %v759, %v759
      %v792 = vpack.c.bf16 %v760, %v760
      %v793 = vpack.c.bf16 %v761, %v761
      %v794 = vpack.c.bf16 %v762, %v762
      %v795 = vpack.c.bf16 %v763, %v763
      %v796 = vpack.c.bf16 %v764, %v764
      %v797 = vpack.c.bf16 %v765, %v765
      %v798 = vpack.c.bf16 %v766, %v766
      %v799 = vpack.c.bf16 %v767, %v767
      %v800 = vpack.c.bf16 %v768, %v768
      %v801 = vpack.c.bf16 %v769, %v769
      %v802 = vpack.c.bf16 %v770, %v770
      %v803 = vpack.c.bf16 %v771, %v771
      %804 = vst [vmem:[%s221] sm:$0xf] %v772
      %805 = vst [vmem:[%s221 + $0x4] sm:$0xf] %v773
      %806 = vst [vmem:[%s221 + $0x8] sm:$0xf] %v774
      %807 = vst [vmem:[%s221 + $0xc] sm:$0xf] %v775
      %808 = vst [vmem:[%s221 + $0x10] sm:$0xf] %v776
      %809 = vst [vmem:[%s221 + $0x14] sm:$0xf] %v777
      %810 = vst [vmem:[%s221 + $0x18] sm:$0xf] %v778
      %811 = vst [vmem:[%s221 + $0x1c] sm:$0xf] %v779
      %812 = vst [vmem:[%s221 + $0x20] sm:$0xf] %v780
      %813 = vst [vmem:[%s221 + $0x24] sm:$0xf] %v781
      %814 = vst [vmem:[%s221 + $0x28] sm:$0xf] %v782
      %815 = vst [vmem:[%s221 + $0x2c] sm:$0xf] %v783
      %816 = vst [vmem:[%s221 + $0x30] sm:$0xf] %v784
      %817 = vst [vmem:[%s221 + $0x34] sm:$0xf] %v785
      %818 = vst [vmem:[%s221 + $0x38] sm:$0xf] %v786
      %819 = vst [vmem:[%s221 + $0x3c] sm:$0xf] %v787
      %820 = vst [vmem:[%s221 + $0x40] sm:$0xf] %v788
      %821 = vst [vmem:[%s221 + $0x44] sm:$0xf] %v789
      %822 = vst [vmem:[%s221 + $0x48] sm:$0xf] %v790
      %823 = vst [vmem:[%s221 + $0x4c] sm:$0xf] %v791
      %824 = vst [vmem:[%s221 + $0x50] sm:$0xf] %v792
      %825 = vst [vmem:[%s221 + $0x54] sm:$0xf] %v793
      %826 = vst [vmem:[%s221 + $0x58] sm:$0xf] %v794
      %827 = vst [vmem:[%s221 + $0x5c] sm:$0xf] %v795
      %828 = vst [vmem:[%s221 + $0x60] sm:$0xf] %v796
      %829 = vst [vmem:[%s221 + $0x64] sm:$0xf] %v797
      %830 = vst [vmem:[%s221 + $0x68] sm:$0xf] %v798
      %831 = vst [vmem:[%s221 + $0x6c] sm:$0xf] %v799
      %832 = vst [vmem:[%s221 + $0x70] sm:$0xf] %v800
      %833 = vst [vmem:[%s221 + $0x74] sm:$0xf] %v801
      %834 = vst [vmem:[%s221 + $0x78] sm:$0xf] %v802
      %835 = vst [vmem:[%s221 + $0x7c] sm:$0xf] %v803
      %p836 = scmp.lt.s32.totalorder %s18, 1
      %s837 = scalar_select %p836, %s18, 1
      %p838 = scmp.lt.s32.totalorder %s19, 0
      %s839 = scalar_select %p838, %s19, 0
      %s840 = smul.addr %s837, 32
      %s841 = sadd.s32 %s839, %s840
      %s842 = smul.addr %s841, 4
      %s843 = scalar_lea.vmem %s3, %s842
      // Predicated region
      $region33: #{meta_conv2d_forward.1} parent=31 // pred_check
        %p844 = pneg %p124
      $region34: #{meta_conv2d_forward.1} parent=31 // pred_check_branch
        %846 = sbr.rel (%p844) target = $region36
      $region35: #{meta_conv2d_forward.1} parent=31 // pred_region
        _
      $region36: #{meta_conv2d_forward.1} parent=31 // pred_fallthru
        _
    $region32: #{meta_conv2d_forward.1} parent=5 // pred_fallthru
      _
    %p847 = scmp.le.s32.totalorder 2, %s9
    // Predicated region
    $region37: #{meta_conv2d_forward.1} parent=5 // pred_check
      %p848 = pneg %p847
    $region38: #{meta_conv2d_forward.1} parent=5 // pred_check_branch
      %850 = sbr.rel (%p848) target = $region40
    $region39: #{meta_conv2d_forward.1} parent=5 // pred_region
      %s851 = ssub.s32 %s9, 2
      // Predicated region
      $region41: #{meta_conv2d_forward.1} parent=39 // pred_check
        %p852 = pneg %p130
      $region42: #{meta_conv2d_forward.1} parent=39 // pred_check_branch
        %854 = sbr.rel (%p852) target = $region44
      $region43: #{meta_conv2d_forward.1} parent=39 // pred_region
        %p855 = scmp.lt.s32.totalorder %s20, 1
        %s856 = scalar_select %p855, %s20, 1
        %p857 = scmp.lt.s32.totalorder %s21, 0
        %s858 = scalar_select %p857, %s21, 0
        %s859 = smul.addr %s856, 32
        %s860 = sadd.s32 %s858, %s859
        %s861 = smul.addr %s860, 4
        %s862 = scalar_lea.vmem %s3, %s861
      $region44: #{meta_conv2d_forward.1} parent=39 // pred_fallthru
        _
    $region40: #{meta_conv2d_forward.1} parent=5 // pred_fallthru
      _
  $region6: #{meta_conv2d_forward.1} parent=0 // loop_footer
    %s13 = sadd.s32 1, %s9
  $region7: #{meta_conv2d_forward.1} parent=0 // loop_footer_branch
    %8 = sbr.rel target = $region3
  $region8: #{meta_conv2d_forward.1} parent=0 // loop_exit
    _

</llo_original>
